<compile_context>
chip_gen: v6e
topology: v6e:2x2x1
jax: 0.10.0
libtpu: 0.0.40
codegen_flags: <defaults>
</compile_context>

<pallas_src>
import functools

import jax
import jax.numpy as jnp
from jax.experimental import pallas as pl
from jax.experimental.pallas import tpu as pltpu


# ----------------------------- sizing helpers -----------------------------
def _vmem_budget():
    """Generation-aware (vmem_limit_bytes, per-step tile budget) in bytes."""
    try:
        cap = int(pltpu.get_tpu_info().vmem_capacity_bytes)
    except Exception:
        cap = 64 * 1024 * 1024  # conservative fallback (v7x physical VMEM per TC)
    return int(cap * 0.75), int(cap * 0.40)


def _mult8_divisors(c):
    """Divisors of c that are multiples of 8, descending."""
    return sorted([d for d in range(8, c + 1, 8) if c % d == 0], reverse=True)


def _pad_channels(x3, c_pad):
    c = x3.shape[1]
    if c == c_pad:
        return x3
    return jnp.pad(x3, ((0, 0), (0, c_pad - c), (0, 0)))


# ----------------------------- kernel helpers -----------------------------
def _bn_tau_scale(x, eps, inv_tau):
    """BatchNorm(affine=False, batch stats) with 1/tau folded in.

    Two-pass (centered) variance -- avoids the E[x^2]-E[x]^2 cancellation issue on real
    activations.  x: (N, C_blk, HW) float32.  Returns (x - mean) * rsqrt(var+eps) / tau.
    """
    n, _, hw = x.shape
    inv_count = 1.0 / (n * hw)
    mean = jnp.sum(jnp.sum(x, axis=2, keepdims=True), axis=0, keepdims=True) * inv_count
    d = x - mean
    var = jnp.sum(jnp.sum(d * d, axis=2, keepdims=True), axis=0, keepdims=True) * inv_count
    return d * (jax.lax.rsqrt(var + eps) * inv_tau)


def _cwd_block_loss(s_sc, t_sc):
    """sum over rows of  sum_l p_t * (log_softmax(t) - log_softmax(s))  along HW.

    Restructured so neither log-softmax slab nor p_t is materialized:
      row = sum(e_t*(a-b))/denom_t - (max_a - max_b) - log(denom_t) + log(denom_s)
    (a = scaled teacher, b = scaled student; per-row reductions only after the slab math).
    """
    max_t = jnp.max(t_sc, axis=-1, keepdims=True)
    max_s = jnp.max(s_sc, axis=-1, keepdims=True)
    e_t = jnp.exp(t_sc - max_t)
    e_s = jnp.exp(s_sc - max_s)
    denom_t = jnp.sum(e_t, axis=-1, keepdims=True)
    denom_s = jnp.sum(e_s, axis=-1, keepdims=True)
    num = jnp.sum(e_t * (t_sc - s_sc), axis=-1, keepdims=True)
    row = (num * (1.0 / denom_t) - (max_t - max_s)
           - jnp.log(denom_t) + jnp.log(denom_s))
    return jnp.sum(row)


# --------------------------------- kernels ---------------------------------
def _cwd_identity_kernel(s_ref, t_ref, out_ref, *, tau, eps, loss_scale):
    """Identity-align stage (Cs == Ct): s and t channel blocks streamed, cast in VMEM."""
    inv_tau = 1.0 / tau
    s_sc = _bn_tau_scale(s_ref[...].astype(jnp.float32), eps, inv_tau)
    t_sc = _bn_tau_scale(t_ref[...].astype(jnp.float32), eps, inv_tau)
    out_ref[0, 0] = _cwd_block_loss(s_sc, t_sc) * loss_scale


def _cwd_align_kernel(w_ref, s_ref, t_ref, out_ref, acc_ref, *, tau, eps, loss_scale):
    """Conv-align stage with Cs-contraction grid axis.

    Accumulates the 1x1 conv (Ct_blk x Cs_tile) @ (Cs_tile x HW) per batch item into an
    f32 VMEM scratch; BN + CWD run in the k == last epilogue.
    """
    k = pl.program_id(1)

    @pl.when(k == 0)
    def _():
        acc_ref[...] = jnp.zeros_like(acc_ref)

    w = w_ref[...]                               # (Ct_blk, Cs_tile), native dtype (bf16 -> MXU)
    n_batch = s_ref.shape[0]
    # N is small & static; looping reuses the same weight tile for all N MXU calls
    # (no N-way weight broadcast materialized in vregs/VMEM).
    # TODO(synk): for small-HW stages a channels-first relayout would fuse these into one
    # (Ct_blk, Cs_tile) x (Cs_tile, N*HW) matmul to keep the 256-wide MXU full.
    for n in range(n_batch):
        prod = jnp.dot(w, s_ref[n], preferred_element_type=jnp.float32)  # (Ct_blk, HW)
        acc_ref[n, :, :] = acc_ref[n, :, :] + prod

    @pl.when(k == pl.num_programs(1) - 1)
    def _():
        inv_tau = 1.0 / tau
        s_sc = _bn_tau_scale(acc_ref[...], eps, inv_tau)
        t_sc = _bn_tau_scale(t_ref[...].astype(jnp.float32), eps, inv_tau)
        out_ref[0, 0] = _cwd_block_loss(s_sc, t_sc) * loss_scale


# --------------------------------- wrappers ---------------------------------
def cwd_stage_loss(s_nchw, t_nchw, align_param=None, *, tau=1.0, eps=1e-5,
                   channel_tile=None, cs_tile=None):
    """One FeatureLoss stage: (optional) 1x1 align + BatchNorm(batch stats) + CWD loss."""
    N, Cs, H, W = s_nchw.shape
    Nt, Ct, Ht, Wt = t_nchw.shape
    assert N == Nt and H == Ht and W == Wt
    HW = H * W
    identity = align_param is None
    if identity:
        assert Cs == Ct, "identity align requires Cs == Ct"

    vmem_limit, tile_budget = _vmem_budget()

    # Free reshapes, NATIVE dtype (no f32 upcast in HBM).
    s3 = s_nchw.reshape(N, Cs, HW)
    t3 = t_nchw.reshape(N, Ct, HW)

    # Zero-pad channel counts to multiples of 8 so channel blocks satisfy the (8,128) rule.
    # Padded channels are identically zero for student and teacher -> exactly 0 loss.
    Ct_pad = ((Ct + 7) // 8) * 8
    t3 = _pad_channels(t3, Ct_pad)
    if identity:
        Cs_pad = Ct_pad
        s3 = _pad_channels(s3, Cs_pad)
    else:
        Cs_pad = ((Cs + 7) // 8) * 8
        s3 = _pad_channels(s3, Cs_pad)

    loss_scale = (tau * tau) / float(Ct * N)     # original (unpadded) Ct, per the PyTorch ref
    s_bytes = s3.dtype.itemsize
    t_bytes = t3.dtype.itemsize
    f32b = 4

    ct_divs = _mult8_divisors(Ct_pad)
    # Prefer >= 2 channel blocks so both TensorCores get work on megacore parts (v7x);
    # on single-TC chips the extra grid step costs ~0.35us (negligible).
    ct_cands = [d for d in ct_divs if d < Ct_pad] or ct_divs

    out_shape = jax.ShapeDtypeStruct(( -(-Ct_pad // (channel_tile or ct_cands[0])), 1), jnp.float32)
    out_dtype_bytes = 4

    if identity:
        if channel_tile is None:
            channel_tile = ct_cands[-1]
            for tc in ct_cands:
                # 2x double-buffered s & t blocks + ~6 block-sized f32 temporaries
                est = (2 * (s_bytes + t_bytes) + 6 * f32b) * N * tc * HW
                if est <= tile_budget:
                    channel_tile = tc
                    break
            # TODO(synk): tile the spatial axis too if even an 8-channel block overflows.
        assert Ct_pad % channel_tile == 0
        G = Ct_pad // channel_tile

        kern = functools.partial(_cwd_identity_kernel, tau=tau, eps=eps, loss_scale=loss_scale)
        cost = pl.CostEstimate(
            flops=int(18 * N * Ct_pad * HW),
            transcendentals=int(2 * N * Ct_pad * HW + 4 * N * Ct_pad),
            bytes_accessed=int((s_bytes + t_bytes) * N * Ct_pad * HW + out_dtype_bytes * G))
        partials = pl.pallas_call(
            kern,
            grid=(G,),
            out_shape=jax.ShapeDtypeStruct((G, 1), jnp.float32),
            in_specs=[pl.BlockSpec((N, channel_tile, HW), lambda c: (0, c, 0)),
                      pl.BlockSpec((N, channel_tile, HW), lambda c: (0, c, 0))],
            out_specs=pl.BlockSpec((1, 1), lambda c: (c, 0),
                                   memory_space=pltpu.MemorySpace.SMEM),
            compiler_params=pltpu.CompilerParams(
                dimension_semantics=("parallel",),
                vmem_limit_bytes=vmem_limit),
            cost_estimate=cost,
        )(s3, t3)
        return jnp.sum(partials)

    # ----- conv-align path -----
    w = align_param[0] if isinstance(align_param, (tuple, list)) else align_param
    # The conv bias is intentionally dropped: BatchNorm with batch stats is shift-invariant
    # per channel, so a per-channel constant has exactly zero effect on the loss.
    w2 = jnp.asarray(w).reshape(Ct, Cs).astype(s3.dtype)
    if Ct_pad != Ct or Cs_pad != Cs:
        w2 = jnp.pad(w2, ((0, Ct_pad - Ct), (0, Cs_pad - Cs)))

    cs_divs = _mult8_divisors(Cs_pad)
    if cs_tile is None:
        cs_tile = cs_divs[-1]
        for tk in cs_divs:
            # double-buffered student block should use <= 1/4 of the tile budget
            if 2 * s_bytes * N * tk * HW <= tile_budget // 4:
                cs_tile = tk
                break
    assert Cs_pad % cs_tile == 0
    K = Cs_pad // cs_tile

    if channel_tile is None:
        channel_tile = ct_cands[-1]
        s_stream = 2 * s_bytes * N * cs_tile * HW
        for tc in ct_cands:
            # streamed student + double-buffered teacher + f32 acc scratch + ~6 f32 temps
            est = s_stream + (2 * t_bytes + 7 * f32b) * N * tc * HW
            if est <= tile_budget:
                channel_tile = tc
                break
    assert Ct_pad % channel_tile == 0
    G = Ct_pad // channel_tile

    kern = functools.partial(_cwd_align_kernel, tau=tau, eps=eps, loss_scale=loss_scale)
    cost = pl.CostEstimate(
        flops=int(2 * N * Ct_pad * Cs_pad * HW + 20 * N * Ct_pad * HW),
        transcendentals=int(2 * N * Ct_pad * HW + 4 * N * Ct_pad),
        bytes_accessed=int(s_bytes * N * Cs_pad * HW * G + t_bytes * N * Ct_pad * HW
                           + w2.dtype.itemsize * Ct_pad * Cs_pad + out_dtype_bytes * G))
    partials = pl.pallas_call(
        kern,
        grid=(G, K),                                  # k (Cs blocks) is the inner, reduction axis
        out_shape=jax.ShapeDtypeStruct((G, 1), jnp.float32),
        in_specs=[pl.BlockSpec((channel_tile, cs_tile), lambda c, k: (c, k)),
                  pl.BlockSpec((N, cs_tile, HW), lambda c, k: (0, k, 0)),
                  pl.BlockSpec((N, channel_tile, HW), lambda c, k: (0, c, 0))],
        out_specs=pl.BlockSpec((1, 1), lambda c, k: (c, 0),
                               memory_space=pltpu.MemorySpace.SMEM),
        scratch_shapes=[pltpu.VMEM((N, channel_tile, HW), jnp.float32)],
        compiler_params=pltpu.CompilerParams(
            dimension_semantics=("parallel", "arbitrary"),
            vmem_limit_bytes=vmem_limit),
        cost_estimate=cost,
    )(w2, s3, t3)
    return jnp.sum(partials)


def feature_loss_cwd(y_s, y_t, align_params, *, tau=1.0, channel_tiles=None, cs_tiles=None):
    """FeatureLoss.forward with distiller='cwd'.  align_params[i] is (w, b), w, or None."""
    n = len(y_s)
    assert len(y_t) == n and len(align_params) == n
    channel_tiles = channel_tiles or [None] * n
    cs_tiles = cs_tiles or [None] * n
    total = None
    for (s, t), ap, ct, ck in zip(zip(y_s, y_t), align_params, channel_tiles, cs_tiles):
        stage = cwd_stage_loss(s, t, ap, tau=tau, channel_tile=ct, cs_tile=ck)
        total = stage if total is None else total + stage
    return total


# ---------------- pure-JAX reference (sanity check, includes the conv bias) ----------------
def _ref_feature_loss_cwd(y_s, y_t, align_params, tau=1.0, eps=1e-5):
    total = jnp.float32(0.0)
    for (s, t), ap in zip(zip(y_s, y_t), align_params):
        s = s.astype(jnp.float32)
        t = t.astype(jnp.float32)
        N, Cs, H, W = s.shape
        Ct = t.shape[1]
        if ap is None:
            s_al = s
        else:
            w, b = ap
            s_al = (jnp.einsum("oc,nchw->nohw", w.reshape(Ct, Cs).astype(jnp.float32), s)
                    + b.reshape(1, Ct, 1, 1).astype(jnp.float32))

        def bn(x):
            mean = jnp.mean(x, axis=(0, 2, 3), keepdims=True)
            var = jnp.mean((x - mean) ** 2, axis=(0, 2, 3), keepdims=True)
            return (x - mean) / jnp.sqrt(var + eps)

        sr = bn(s_al).reshape(N * Ct, H * W) / tau
        tr = bn(t).reshape(N * Ct, H * W) / tau
        p_t = jax.nn.softmax(tr, axis=1)
        cost = jnp.sum(p_t * (jax.nn.log_softmax(tr, axis=1)
                              - jax.nn.log_softmax(sr, axis=1))) * tau ** 2
        total = total + cost / (Ct * N)
    return total


if __name__ == "__main__":
    key = jax.random.PRNGKey(0)
    ks = jax.random.split(key, 16)
    N = 2

    # Stage 0: bf16 activations, conv align Cs=4 -> Ct=8 (Cs zero-padded to 8), single block
    s0 = jax.random.normal(ks[0], (N, 4, 16, 16), jnp.float32).astype(jnp.bfloat16)
    t0 = jax.random.normal(ks[1], (N, 8, 16, 16), jnp.float32).astype(jnp.bfloat16)
    w0 = (0.1 * jax.random.normal(ks[2], (8, 4, 1, 1), jnp.float32)).astype(jnp.bfloat16)
    b0 = (0.01 * jax.random.normal(ks[3], (8,), jnp.float32)).astype(jnp.bfloat16)

    # Stage 1: identity, f32, Cs == Ct == 8 (single channel block)
    s1 = jax.random.normal(ks[4], (N, 8, 8, 16), jnp.float32)
    t1 = jax.random.normal(ks[5], (N, 8, 8, 16), jnp.float32)

    # Stage 2: identity, f32, Ct=16 -> two channel blocks (parallel grid axis)
    s2 = jax.random.normal(ks[6], (N, 16, 8, 8), jnp.float32)
    t2 = jax.random.normal(ks[7], (N, 16, 8, 8), jnp.float32)

    # Stage 3: conv align f32, Cs=16 -> Ct=24, cs_tile=8 forces K=2 accumulation steps, G=3
    s3 = jax.random.normal(ks[8], (N, 16, 8, 8), jnp.float32)
    t3 = jax.random.normal(ks[9], (N, 24, 8, 8), jnp.float32)
    w3 = 0.1 * jax.random.normal(ks[10], (24, 16, 1, 1), jnp.float32)
    b3 = 0.01 * jax.random.normal(ks[11], (24,), jnp.float32)

    # Stage 4: identity, f32, C=12 (not a multiple of 8 -> zero-padded to 16; exact)
    s4 = jax.random.normal(ks[12], (N, 12, 8, 8), jnp.float32)
    t4 = jax.random.normal(ks[13], (N, 12, 8, 8), jnp.float32)

    y_s = [s0, s1, s2, s3, s4]
    y_t = [t0, t1, t2, t3, t4]
    params = [(w0, b0), None, None, (w3, b3), None]
    ct_tiles = [None, None, 8, 8, None]
    cs_tiles = [None, None, None, 8, None]

    loss = feature_loss_cwd(y_s, y_t, params, tau=1.0,
                            channel_tiles=ct_tiles, cs_tiles=cs_tiles)
    loss = jax.block_until_ready(loss)

    ref = jax.block_until_ready(_ref_feature_loss_cwd(y_s, y_t, params, tau=1.0))
    assert jnp.allclose(loss, ref, rtol=2e-3, atol=2e-3), (loss, ref)

    print("KERNEL_OK")
</pallas_src>

<mosaic_0001>
module attributes {stable_mosaic.version = 11 : i64} {
  func.func @_cwd_align_kernel(%arg0: i32, %arg1: i32, %arg2: memref<8x8xbf16, #tpu.memory_space<vmem>>, %arg3: memref<2x8x256xbf16, #tpu.memory_space<vmem>>, %arg4: memref<2x8x256xbf16, #tpu.memory_space<vmem>>, %arg5: memref<1x1xf32, #tpu.memory_space<smem>>, %arg6: memref<2x8x256xf32, #tpu.memory_space<vmem>>) attributes {dimension_semantics = [#tpu.dimension_semantics<parallel>, #tpu.dimension_semantics<arbitrary>], iteration_bounds = array<i64: 1, 1>, scalar_prefetch = 0 : i64, scratch_operands = 1 : i64, tpu.core_type = #tpu.core_type<tc>, window_params = [{transform_indices = @transform_0, window_bounds = array<i64: 8, 8>}, {transform_indices = @transform_1, window_bounds = array<i64: 2, 8, 256>}, {transform_indices = @transform_2, window_bounds = array<i64: 2, 8, 256>}, {transform_indices = @transform_3, window_bounds = array<i64: 1, 1>}]} {
    %c0_i32 = arith.constant 0 : i32
    %0 = arith.cmpi eq, %arg1, %c0_i32 : i32
    %1 = arith.extui %0 : i1 to i32
    %c0_i32_0 = arith.constant 0 : i32
    %2 = arith.cmpi ne, %1, %c0_i32_0 : i32
    scf.if %2 {
      %cst_22 = arith.constant 0.000000e+00 : f32
      %25 = vector.broadcast %cst_22 : f32 to vector<2x8x256xf32>
      %c0_23 = arith.constant 0 : index
      %c0_24 = arith.constant 0 : index
      %c0_25 = arith.constant 0 : index
      %26 = vector.load %arg6[%c0_23, %c0_24, %c0_25] : memref<2x8x256xf32, #tpu.memory_space<vmem>>, vector<2x8x256xf32>
      tpu.vector_store %arg6[%c0_23, %c0_24, %c0_25], %25 {strides = array<i32>} : memref<2x8x256xf32, #tpu.memory_space<vmem>>, vector<2x8x256xf32>,
    } else {
    }
    %c0 = arith.constant 0 : index
    %c0_1 = arith.constant 0 : index
    %3 = vector.load %arg2[%c0, %c0_1] : memref<8x8xbf16, #tpu.memory_space<vmem>>, vector<8x8xbf16>
    %c0_2 = arith.constant 0 : index
    %c0_3 = arith.constant 0 : index
    %c0_4 = arith.constant 0 : index
    %4 = vector.load %arg3[%c0_2, %c0_3, %c0_4] : memref<2x8x256xbf16, #tpu.memory_space<vmem>>, vector<1x8x256xbf16>
    %5 = vector.shape_cast %4 : vector<1x8x256xbf16> to vector<8x256xbf16>
    %cst = arith.constant dense<0.000000e+00> : vector<8x256xf32>
    %6 = tpu.matmul %3, %5, %cst {dimension_numbers = #tpu.dot_dimension_numbers<[1], [0], [0], [1], [0, 0, 1, 1], [], []>} : vector<8x8xbf16>, vector<8x256xbf16>, vector<8x256xf32> -> vector<8x256xf32>
    %c0_5 = arith.constant 0 : index
    %c0_6 = arith.constant 0 : index
    %c0_7 = arith.constant 0 : index
    %7 = vector.load %arg6[%c0_5, %c0_6, %c0_7] : memref<2x8x256xf32, #tpu.memory_space<vmem>>, vector<1x8x256xf32>
    %8 = vector.shape_cast %7 : vector<1x8x256xf32> to vector<8x256xf32>
    %9 = arith.addf %8, %6 : vector<8x256xf32>
    %c0_8 = arith.constant 0 : index
    %c0_9 = arith.constant 0 : index
    %c0_10 = arith.constant 0 : index
    %10 = vector.load %arg6[%c0_8, %c0_9, %c0_10] : memref<2x8x256xf32, #tpu.memory_space<vmem>>, vector<1x8x256xf32>
    %11 = vector.shape_cast %10 : vector<1x8x256xf32> to vector<8x256xf32>
    %12 = vector.shape_cast %9 : vector<8x256xf32> to vector<1x8x256xf32>
    tpu.vector_store %arg6[%c0_8, %c0_9, %c0_10], %12 {strides = array<i32>} : memref<2x8x256xf32, #tpu.memory_space<vmem>>, vector<1x8x256xf32>,
    %c1 = arith.constant 1 : index
    %c0_11 = arith.constant 0 : index
    %c0_12 = arith.constant 0 : index
    %13 = vector.load %arg3[%c1, %c0_11, %c0_12] : memref<2x8x256xbf16, #tpu.memory_space<vmem>>, vector<1x8x256xbf16>
    %14 = vector.shape_cast %13 : vector<1x8x256xbf16> to vector<8x256xbf16>
    %cst_13 = arith.constant dense<0.000000e+00> : vector<8x256xf32>
    %15 = tpu.matmul %3, %14, %cst_13 {dimension_numbers = #tpu.dot_dimension_numbers<[1], [0], [0], [1], [0, 0, 1, 1], [], []>} : vector<8x8xbf16>, vector<8x256xbf16>, vector<8x256xf32> -> vector<8x256xf32>
    %c1_14 = arith.constant 1 : index
    %c0_15 = arith.constant 0 : index
    %c0_16 = arith.constant 0 : index
    %16 = vector.load %arg6[%c1_14, %c0_15, %c0_16] : memref<2x8x256xf32, #tpu.memory_space<vmem>>, vector<1x8x256xf32>
    %17 = vector.shape_cast %16 : vector<1x8x256xf32> to vector<8x256xf32>
    %18 = arith.addf %17, %15 : vector<8x256xf32>
    %c1_17 = arith.constant 1 : index
    %c0_18 = arith.constant 0 : index
    %c0_19 = arith.constant 0 : index
    %19 = vector.load %arg6[%c1_17, %c0_18, %c0_19] : memref<2x8x256xf32, #tpu.memory_space<vmem>>, vector<1x8x256xf32>
    %20 = vector.shape_cast %19 : vector<1x8x256xf32> to vector<8x256xf32>
    %21 = vector.shape_cast %18 : vector<8x256xf32> to vector<1x8x256xf32>
    tpu.vector_store %arg6[%c1_17, %c0_18, %c0_19], %21 {strides = array<i32>} : memref<2x8x256xf32, #tpu.memory_space<vmem>>, vector<1x8x256xf32>,
    %c0_i32_20 = arith.constant 0 : i32
    %22 = arith.cmpi eq, %arg1, %c0_i32_20 : i32
    %23 = arith.extui %22 : i1 to i32
    %c0_i32_21 = arith.constant 0 : i32
    %24 = arith.cmpi ne, %23, %c0_i32_21 : i32
    scf.if %24 {
      %c0_22 = arith.constant 0 : index
      %c0_23 = arith.constant 0 : index
      %c0_24 = arith.constant 0 : index
      %25 = vector.load %arg6[%c0_22, %c0_23, %c0_24] : memref<2x8x256xf32, #tpu.memory_space<vmem>>, vector<2x8x256xf32>
      %cst_25 = arith.constant dense<0.000000e+00> : vector<2x8xf32>
      %26 = vector.multi_reduction <add>, %25, %cst_25 [2] : vector<2x8x256xf32> to vector<2x8xf32>
      %27 = vector.shape_cast %26 : vector<2x8xf32> to vector<2x8x1xf32>
      %cst_26 = arith.constant dense<0.000000e+00> : vector<8x1xf32>
      %28 = vector.multi_reduction <add>, %27, %cst_26 [0] : vector<2x8x1xf32> to vector<8x1xf32>
      %29 = vector.shape_cast %28 : vector<8x1xf32> to vector<1x8x1xf32>
      %cst_27 = arith.constant 0.001953125 : f32
      %30 = vector.broadcast %cst_27 : f32 to vector<1x8x1xf32>
      %31 = arith.mulf %29, %30 : vector<1x8x1xf32>
      %32 = vector.broadcast %31 : vector<1x8x1xf32> to vector<2x8x256xf32>
      %33 = arith.subf %25, %32 : vector<2x8x256xf32>
      %34 = arith.mulf %33, %33 : vector<2x8x256xf32>
      %cst_28 = arith.constant dense<0.000000e+00> : vector<2x8xf32>
      %35 = vector.multi_reduction <add>, %34, %cst_28 [2] : vector<2x8x256xf32> to vector<2x8xf32>
      %36 = vector.shape_cast %35 : vector<2x8xf32> to vector<2x8x1xf32>
      %cst_29 = arith.constant dense<0.000000e+00> : vector<8x1xf32>
      %37 = vector.multi_reduction <add>, %36, %cst_29 [0] : vector<2x8x1xf32> to vector<8x1xf32>
      %38 = vector.shape_cast %37 : vector<8x1xf32> to vector<1x8x1xf32>
      %cst_30 = arith.constant 0.001953125 : f32
      %39 = vector.broadcast %cst_30 : f32 to vector<1x8x1xf32>
      %40 = arith.mulf %38, %39 : vector<1x8x1xf32>
      %cst_31 = arith.constant 9.99999974E-6 : f32
      %41 = vector.broadcast %cst_31 : f32 to vector<1x8x1xf32>
      %42 = arith.addf %40, %41 : vector<1x8x1xf32>
      %43 = math.rsqrt %42 : vector<1x8x1xf32>
      %cst_32 = arith.constant 1.000000e+00 : f32
      %44 = vector.broadcast %cst_32 : f32 to vector<1x8x1xf32>
      %45 = arith.mulf %43, %44 : vector<1x8x1xf32>
      %46 = vector.broadcast %45 : vector<1x8x1xf32> to vector<2x8x256xf32>
      %47 = arith.mulf %33, %46 : vector<2x8x256xf32>
      %c0_33 = arith.constant 0 : index
      %c0_34 = arith.constant 0 : index
      %c0_35 = arith.constant 0 : index
      %48 = vector.load %arg4[%c0_33, %c0_34, %c0_35] : memref<2x8x256xbf16, #tpu.memory_space<vmem>>, vector<2x8x256xbf16>
      %49 = arith.extf %48 : vector<2x8x256xbf16> to vector<2x8x256xf32>
      %cst_36 = arith.constant dense<0.000000e+00> : vector<2x8xf32>
      %50 = vector.multi_reduction <add>, %49, %cst_36 [2] : vector<2x8x256xf32> to vector<2x8xf32>
      %51 = vector.shape_cast %50 : vector<2x8xf32> to vector<2x8x1xf32>
      %cst_37 = arith.constant dense<0.000000e+00> : vector<8x1xf32>
      %52 = vector.multi_reduction <add>, %51, %cst_37 [0] : vector<2x8x1xf32> to vector<8x1xf32>
      %53 = vector.shape_cast %52 : vector<8x1xf32> to vector<1x8x1xf32>
      %cst_38 = arith.constant 0.001953125 : f32
      %54 = vector.broadcast %cst_38 : f32 to vector<1x8x1xf32>
      %55 = arith.mulf %53, %54 : vector<1x8x1xf32>
      %56 = vector.broadcast %55 : vector<1x8x1xf32> to vector<2x8x256xf32>
      %57 = arith.subf %49, %56 : vector<2x8x256xf32>
      %58 = arith.mulf %57, %57 : vector<2x8x256xf32>
      %cst_39 = arith.constant dense<0.000000e+00> : vector<2x8xf32>
      %59 = vector.multi_reduction <add>, %58, %cst_39 [2] : vector<2x8x256xf32> to vector<2x8xf32>
      %60 = vector.shape_cast %59 : vector<2x8xf32> to vector<2x8x1xf32>
      %cst_40 = arith.constant dense<0.000000e+00> : vector<8x1xf32>
      %61 = vector.multi_reduction <add>, %60, %cst_40 [0] : vector<2x8x1xf32> to vector<8x1xf32>
      %62 = vector.shape_cast %61 : vector<8x1xf32> to vector<1x8x1xf32>
      %cst_41 = arith.constant 0.001953125 : f32
      %63 = vector.broadcast %cst_41 : f32 to vector<1x8x1xf32>
      %64 = arith.mulf %62, %63 : vector<1x8x1xf32>
      %cst_42 = arith.constant 9.99999974E-6 : f32
      %65 = vector.broadcast %cst_42 : f32 to vector<1x8x1xf32>
      %66 = arith.addf %64, %65 : vector<1x8x1xf32>
      %67 = math.rsqrt %66 : vector<1x8x1xf32>
      %cst_43 = arith.constant 1.000000e+00 : f32
      %68 = vector.broadcast %cst_43 : f32 to vector<1x8x1xf32>
      %69 = arith.mulf %67, %68 : vector<1x8x1xf32>
      %70 = vector.broadcast %69 : vector<1x8x1xf32> to vector<2x8x256xf32>
      %71 = arith.mulf %57, %70 : vector<2x8x256xf32>
      %cst_44 = arith.constant dense<0xFF800000> : vector<2x8xf32>
      %72 = vector.multi_reduction <maximumf>, %71, %cst_44 [2] : vector<2x8x256xf32> to vector<2x8xf32>
      %73 = vector.shape_cast %72 : vector<2x8xf32> to vector<2x8x1xf32>
      %cst_45 = arith.constant dense<0xFF800000> : vector<2x8xf32>
      %74 = vector.multi_reduction <maximumf>, %47, %cst_45 [2] : vector<2x8x256xf32> to vector<2x8xf32>
      %75 = vector.shape_cast %74 : vector<2x8xf32> to vector<2x8x1xf32>
      %76 = vector.broadcast %73 : vector<2x8x1xf32> to vector<2x8x256xf32>
      %77 = arith.subf %71, %76 : vector<2x8x256xf32>
      %78 = math.exp %77 : vector<2x8x256xf32>
      %79 = vector.broadcast %75 : vector<2x8x1xf32> to vector<2x8x256xf32>
      %80 = arith.subf %47, %79 : vector<2x8x256xf32>
      %81 = math.exp %80 : vector<2x8x256xf32>
      %cst_46 = arith.constant dense<0.000000e+00> : vector<2x8xf32>
      %82 = vector.multi_reduction <add>, %78, %cst_46 [2] : vector<2x8x256xf32> to vector<2x8xf32>
      %83 = vector.shape_cast %82 : vector<2x8xf32> to vector<2x8x1xf32>
      %cst_47 = arith.constant dense<0.000000e+00> : vector<2x8xf32>
      %84 = vector.multi_reduction <add>, %81, %cst_47 [2] : vector<2x8x256xf32> to vector<2x8xf32>
      %85 = vector.shape_cast %84 : vector<2x8xf32> to vector<2x8x1xf32>
      %86 = arith.subf %71, %47 : vector<2x8x256xf32>
      %87 = arith.mulf %78, %86 : vector<2x8x256xf32>
      %cst_48 = arith.constant dense<0.000000e+00> : vector<2x8xf32>
      %88 = vector.multi_reduction <add>, %87, %cst_48 [2] : vector<2x8x256xf32> to vector<2x8xf32>
      %89 = vector.shape_cast %88 : vector<2x8xf32> to vector<2x8x1xf32>
      %cst_49 = arith.constant 1.000000e+00 : f32
      %90 = vector.broadcast %cst_49 : f32 to vector<2x8x1xf32>
      %91 = arith.divf %90, %83 : vector<2x8x1xf32>
      %92 = arith.mulf %89, %91 : vector<2x8x1xf32>
      %93 = arith.subf %73, %75 : vector<2x8x1xf32>
      %94 = arith.subf %92, %93 : vector<2x8x1xf32>
      %95 = math.log %83 : vector<2x8x1xf32>
      %96 = arith.subf %94, %95 : vector<2x8x1xf32>
      %97 = math.log %85 : vector<2x8x1xf32>
      %98 = arith.addf %96, %97 : vector<2x8x1xf32>
      %99 = vector.shape_cast %98 : vector<2x8x1xf32> to vector<1x2x8x1xf32>
      %cst_50 = arith.constant dense<0.000000e+00> : vector<1xf32>
      %100 = vector.multi_reduction <add>, %99, %cst_50 [1, 2, 3] : vector<1x2x8x1xf32> to vector<1xf32>
      %101 = vector.shape_cast %100 : vector<1xf32> to vector<1x1x1x1xf32>
      %102 = vector.extract %101[0, 0, 0, 0] : f32 from vector<1x1x1x1xf32>
      %cst_51 = arith.constant 6.250000e-02 : f32
      %103 = arith.mulf %102, %cst_51 : f32
      %c0_52 = arith.constant 0 : index
      %c0_53 = arith.constant 0 : index
      %104 = memref.load %arg5[%c0_52, %c0_53] : memref<1x1xf32, #tpu.memory_space<smem>>
      memref.store %103, %arg5[%c0_52, %c0_53] : memref<1x1xf32, #tpu.memory_space<smem>>
    } else {
    }
    return
  }
  func.func @transform_0(%arg0: i32, %arg1: i32) -> (i32, i32) {
    %c0_i32 = arith.constant 0 : i32
    return %arg0, %arg1 : i32, i32
  }
  func.func @transform_1(%arg0: i32, %arg1: i32) -> (i32, i32, i32) {
    %c0_i32 = arith.constant 0 : i32
    %c0_i32_0 = arith.constant 0 : i32
    %c0_i32_1 = arith.constant 0 : i32
    return %c0_i32, %arg1, %c0_i32_0 : i32, i32, i32
  }
  func.func @transform_2(%arg0: i32, %arg1: i32) -> (i32, i32, i32) {
    %c0_i32 = arith.constant 0 : i32
    %c0_i32_0 = arith.constant 0 : i32
    %c0_i32_1 = arith.constant 0 : i32
    return %c0_i32, %arg0, %c0_i32_0 : i32, i32, i32
  }
  func.func @transform_3(%arg0: i32, %arg1: i32) -> (i32, i32) {
    %c0_i32 = arith.constant 0 : i32
    %c0_i32_0 = arith.constant 0 : i32
    return %arg0, %c0_i32 : i32, i32
  }
}

</mosaic_0001>

<llo_original>
// kernel: tpu_custom_call.1
$region0: #{tpu_custom_call.1}
  #allocation0 [shape = 'u32[]', space=smem, size = 0x4, offset = 0x4, fixed_abs, tag = 'smem constant byte address 0x4 - core index']
  #allocation1 [shape = 'u32[144,128]{1,0:T(1,128)}', space=vmem, size = 0x12000, scoped, tag = 'internal scratch']
  #allocation2 [shape = 'f32[2,8,256]{2,1,0:T(8,128)}', space=vmem, size = 0x4000, scoped, tag = 'scratch operand']
  %s0 = inlined_call_operand.hbm [shape: bf16[8,8], index: 0, kind: input, shape index: {}]
  %s1 = inlined_call_operand.hbm [shape: bf16[2,8,256], index: 1, kind: input, shape index: {}]
  %s2 = inlined_call_operand.hbm [shape: bf16[2,8,256], index: 2, kind: input, shape index: {}]
  %s3 = inlined_call_operand.hbm [shape: f32[1,1], index: 3, kind: output, shape index: {}]
  %s4 = sld [smem:[#allocation0]]
  $region42: #{tpu_custom_call.1} parent=0
    _
  %s6 = ssub.s32 1, %s4
  %s7 = scalar_select 0, %s6, %s4
  $region1: #{tpu_custom_call.1} parent=0
    #allocation3 [shape = 'u8[2048]{0}', space=vmem, size = 0x800, scoped, tag = 'input window, operand 0, single buffered']
    #allocation4 [shape = 's32[1]{0}', space=sflag, size = 0x4, scoped, tag = 'scoped memory for tpu_custom_call.1']
    #allocation5 [shape = 's32[1]{0}', space=sflag, size = 0x4, scoped, tag = 'scoped memory for tpu_custom_call.1']
    #allocation6 [shape = 'u8[8192]{0}', space=vmem, size = 0x2000, scoped, tag = 'input window, operand 1, single buffered']
    #allocation7 [shape = 's32[1]{0}', space=sflag, size = 0x4, scoped, tag = 'scoped memory for tpu_custom_call.1']
    #allocation8 [shape = 'u8[8192]{0}', space=vmem, size = 0x2000, scoped, tag = 'input window, operand 2, single buffered']
    #allocation9 [shape = 'u8[512]{0}', space=smem, size = 0x200, scoped, tag = 'output window, operand 0, single buffered']
    %8 = vsyncpa [#allocation4], 0
    %9 = vsyncpa [#allocation7], 0
    %10 = vsyncpa [#allocation5], 0
    // Predicated region
    $region2: #{tpu_custom_call.1} parent=1 // pred_check
      _
    $region3: #{tpu_custom_call.1} parent=1 // pred_check_branch
      %12 = sbr.rel (0) target = $region5
    $region4: #{tpu_custom_call.1} parent=1 // pred_region
      %s14 = ssub.s32 64, 64
      %15 = vsyncadd [#allocation4], %s14
      %s17 = sshll.u32 [#allocation3], 4
      %s18 = int_to_ptr.vmem [resolvable:$true] %s17
      %20 = dma.hbm_to_vmem [thread:$0]  %s0, 64, %s18, [#allocation4]
    $region5: #{tpu_custom_call.1} parent=1 // pred_fallthru
      _
    // Predicated region
    $region6: #{tpu_custom_call.1} parent=1 // pred_check
      _
    $region7: #{tpu_custom_call.1} parent=1 // pred_check_branch
      %22 = sbr.rel (0) target = $region9
    $region8: #{tpu_custom_call.1} parent=1 // pred_region
      %s24 = ssub.s32 256, 256
      %25 = vsyncadd [#allocation7], %s24
      %s26 = sshll.u32 [#allocation6], 4
      %s27 = int_to_ptr.vmem [resolvable:$true] %s26
      %32 = dma.hbm_to_vmem [thread:$0]  %s1, 256, %s27, [#allocation7], 128, 128, 8
    $region9: #{tpu_custom_call.1} parent=1 // pred_fallthru
      _
    // Predicated region
    $region10: #{tpu_custom_call.1} parent=1 // pred_check
      _
    $region11: #{tpu_custom_call.1} parent=1 // pred_check_branch
      %34 = sbr.rel (0) target = $region13
    $region12: #{tpu_custom_call.1} parent=1 // pred_region
      %s36 = ssub.s32 256, 256
      %37 = vsyncadd [#allocation7], %s36
      %s38 = sshll.u32 [#allocation8], 4
      %s39 = int_to_ptr.vmem [resolvable:$true] %s38
      %44 = dma.hbm_to_vmem [thread:$0]  %s2, 256, %s39, [#allocation7], 128, 128, 8
    $region13: #{tpu_custom_call.1} parent=1 // pred_fallthru
      _
    // Predicated region
    $region14: #{tpu_custom_call.1} parent=1 // pred_check
      _
    $region15: #{tpu_custom_call.1} parent=1 // pred_check_branch
      %46 = sbr.rel (0) target = $region17
    $region16: #{tpu_custom_call.1} parent=1 // pred_region
      %47 = dma.done [#allocation4], 64
    $region17: #{tpu_custom_call.1} parent=1 // pred_fallthru
      _
    // Predicated region
    $region18: #{tpu_custom_call.1} parent=1 // pred_check
      _
    $region19: #{tpu_custom_call.1} parent=1 // pred_check_branch
      %49 = sbr.rel (0) target = $region21
    $region20: #{tpu_custom_call.1} parent=1 // pred_region
      %50 = dma.done [#allocation7], 256
    $region21: #{tpu_custom_call.1} parent=1 // pred_fallthru
      _
    // Predicated region
    $region22: #{tpu_custom_call.1} parent=1 // pred_check
      _
    $region23: #{tpu_custom_call.1} parent=1 // pred_check_branch
      %52 = sbr.rel (0) target = $region25
    $region24: #{tpu_custom_call.1} parent=1 // pred_region
      %53 = dma.done [#allocation7], 256
    $region25: #{tpu_custom_call.1} parent=1 // pred_fallthru
      _
    %p55 = scmp.eq.s32.totalorder 0, 0
    // Predicated region
    $region26: #{tpu_custom_call.1} parent=1 // pred_check
      %p56 = pneg %p55
    $region27: #{tpu_custom_call.1} parent=1 // pred_check_branch
      %58 = sbr.rel (%p56) target = $region29
    $region28: #{tpu_custom_call.1} parent=1 // pred_region
      %59 = vst [vmem:[#allocation2] sm:$0xff] 0.0
      %60 = vst [vmem:[#allocation2 + $0x8] sm:$0xff] 0.0
      %61 = vst [vmem:[#allocation2 + $0x10] sm:$0xff] 0.0
      %62 = vst [vmem:[#allocation2 + $0x18] sm:$0xff] 0.0
    $region29: #{tpu_custom_call.1} parent=1 // pred_fallthru
      _
    %v63 = vld [vmem:[#allocation3] sm:$0xf]
    %v64 = vld [vmem:[#allocation6] sm:$0xff]
    %v66 = vunpack.c.l.b16 %v64
    %v67 = vunpack.c.h.b16 %v64
    %v68 = vpack.c.b16 %v66, %v66
    %v69 = vpack.c.b16 %v67, %v67
    %vm70 = vcmask 64512
    %v72 = vsel %vm70, %v63, 0
    %vm74 = vcmask 1043456
    %v76 = vsel %vm74, %v68, 0
    %v79 = vsel %vm74, %v69, 0
    %81 = vmatprep.subr.bf16.mxu0 0
    %82 = vmatpush1.bf16.msra.mxu0 0
    %83 = vmatprep.subr.bf16.mxu0 0
    %84 = vmatpush1.bf16.msra.mxu0 0
    %85 = vmatprep.subr.bf16.mxu0 0
    %86 = vmatpush1.bf16.msra.mxu0 0
    %87 = vmatprep.subr.bf16.mxu0 0
    %88 = vmatpush1.bf16.msra.mxu0 0
    %89 = vmatprep.subr.bf16.mxu0 0
    %90 = vmatpush1.bf16.msra.mxu0 0
    %91 = vmatprep.subr.bf16.mxu0 0
    %92 = vmatpush1.bf16.msra.mxu0 0
    %93 = vmatprep.subr.bf16.mxu0 0
    %94 = vmatpush1.bf16.msra.mxu0 0
    %95 = vmatprep.subr.bf16.mxu0 %v79
    %96 = vmatpush1.bf16.msra.mxu0 %v76
    %97 = vmatprep.subr.bf16.mxu0 0
    %98 = vmatpush2.bf16.msra.mxu0 0
    %99 = vmatprep.subr.bf16.mxu0 0
    %100 = vmatpush2.bf16.msra.mxu0 0
    %101 = vmatprep.subr.bf16.mxu0 0
    %102 = vmatpush2.bf16.msra.mxu0 0
    %103 = vmatprep.subr.bf16.mxu0 0
    %104 = vmatpush2.bf16.msra.mxu0 0
    %105 = vmatprep.subr.bf16.mxu0 0
    %106 = vmatpush2.bf16.msra.mxu0 0
    %107 = vmatprep.subr.bf16.mxu0 0
    %108 = vmatpush2.bf16.msra.mxu0 0
    %109 = vmatprep.subr.bf16.mxu0 0
    %110 = vmatpush2.bf16.msra.mxu0 0
    %111 = vmatprep.subr.bf16.mxu0 0
    %112 = vmatpush2.bf16.msra.mxu0 0
    %113 = vmatprep.mubr.bf16.mxu0 0
    %114 = vmatmul.mubr.bf16.gmra.mxu0 %v72
    %v115 = vpop.f32.mrf.mxu0
    %v116 = vadd.f32 0.0, %v115
    %v117 = vpop.f32.mrf.mxu0
    %v118 = vadd.f32 0.0, %v117
    %v119 = vpop.f32.mrf.mxu0
    %v120 = vpop.f32.mrf.mxu0
    %121 = vdwg.mxu0
    %v122 = vld [vmem:[#allocation2] sm:$0xff]
    %v123 = vld [vmem:[#allocation2 + $0x8] sm:$0xff]
    %v124 = vadd.f32 %v122, %v116
    %v125 = vadd.f32 %v123, %v118
    %126 = vst [vmem:[#allocation2] sm:$0xff] %v124
    %127 = vst [vmem:[#allocation2 + $0x8] sm:$0xff] %v125
    %s128 = scalar_lea.vmem [#allocation6], 8
    %v129 = vld [vmem:[%s128] sm:$0xff]
    %v131 = vunpack.c.l.b16 %v129
    %v132 = vunpack.c.h.b16 %v129
    %v133 = vpack.c.b16 %v131, %v131
    %v134 = vpack.c.b16 %v132, %v132
    %v136 = vsel %vm74, %v133, 0
    %v139 = vsel %vm74, %v134, 0
    %141 = vmatprep.subr.bf16.mxu0 0
    %142 = vmatpush1.bf16.msra.mxu0 0
    %143 = vmatprep.subr.bf16.mxu0 0
    %144 = vmatpush1.bf16.msra.mxu0 0
    %145 = vmatprep.subr.bf16.mxu0 0
    %146 = vmatpush1.bf16.msra.mxu0 0
    %147 = vmatprep.subr.bf16.mxu0 0
    %148 = vmatpush1.bf16.msra.mxu0 0
    %149 = vmatprep.subr.bf16.mxu0 0
    %150 = vmatpush1.bf16.msra.mxu0 0
    %151 = vmatprep.subr.bf16.mxu0 0
    %152 = vmatpush1.bf16.msra.mxu0 0
    %153 = vmatprep.subr.bf16.mxu0 0
    %154 = vmatpush1.bf16.msra.mxu0 0
    %155 = vmatprep.subr.bf16.mxu0 %v139
    %156 = vmatpush1.bf16.msra.mxu0 %v136
    %157 = vmatprep.subr.bf16.mxu0 0
    %158 = vmatpush2.bf16.msra.mxu0 0
    %159 = vmatprep.subr.bf16.mxu0 0
    %160 = vmatpush2.bf16.msra.mxu0 0
    %161 = vmatprep.subr.bf16.mxu0 0
    %162 = vmatpush2.bf16.msra.mxu0 0
    %163 = vmatprep.subr.bf16.mxu0 0
    %164 = vmatpush2.bf16.msra.mxu0 0
    %165 = vmatprep.subr.bf16.mxu0 0
    %166 = vmatpush2.bf16.msra.mxu0 0
    %167 = vmatprep.subr.bf16.mxu0 0
    %168 = vmatpush2.bf16.msra.mxu0 0
    %169 = vmatprep.subr.bf16.mxu0 0
    %170 = vmatpush2.bf16.msra.mxu0 0
    %171 = vmatprep.subr.bf16.mxu0 0
    %172 = vmatpush2.bf16.msra.mxu0 0
    %173 = vmatprep.mubr.bf16.mxu0 0
    %174 = vmatmul.mubr.bf16.gmra.mxu0 %v72
    %v175 = vpop.f32.mrf.mxu0
    %v176 = vadd.f32 0.0, %v175
    %v177 = vpop.f32.mrf.mxu0
    %v178 = vadd.f32 0.0, %v177
    %v179 = vpop.f32.mrf.mxu0
    %v180 = vpop.f32.mrf.mxu0
    %181 = vdwg.mxu0
    %s182 = scalar_lea.vmem [#allocation2], 16
    %v183 = vld [vmem:[%s182] sm:$0xff]
    %v184 = vld [vmem:[%s182 + $0x8] sm:$0xff]
    %v185 = vadd.f32 %v183, %v176
    %v186 = vadd.f32 %v184, %v178
    %187 = vst [vmem:[%s182] sm:$0xff] %v185
    %188 = vst [vmem:[%s182 + $0x8] sm:$0xff] %v186
    // Predicated region
    $region30: #{tpu_custom_call.1} parent=1 // pred_check
      %p189 = pneg %p55
    $region31: #{tpu_custom_call.1} parent=1 // pred_check_branch
      %191 = sbr.rel (%p189) target = $region33
    $region32: #{tpu_custom_call.1} parent=1 // pred_region
      %v192 = vld [vmem:[#allocation2] sm:$0xff]
      %v193 = vld [vmem:[#allocation2 + $0x8] sm:$0xff]
      %v194 = vld [vmem:[#allocation2 + $0x10] sm:$0xff]
      %v195 = vld [vmem:[#allocation2 + $0x18] sm:$0xff]
      %v196 = vadd.f32 %v192, %v193
      %197 = vadd.xlane.f32.xlu0 %v196
      %v198 = vpop.xlane.xlu0 %197
      %v199 = vadd.f32 %v194, %v195
      %200 = vadd.xlane.f32.xlu0 %v199
      %v201 = vpop.xlane.xlu0 %200
      %v202 = vadd.f32 %v198, %v201
      %v203 = vmul.f32 %v202, 0.001953125
      %v204 = vsub.f32 %v192, %v203
      %v205 = vsub.f32 %v193, %v203
      %v206 = vsub.f32 %v194, %v203
      %v207 = vsub.f32 %v195, %v203
      %v208 = vmul.f32 %v204, %v204
      %v209 = vmul.f32 %v205, %v205
      %v210 = vmul.f32 %v206, %v206
      %v211 = vmul.f32 %v207, %v207
      %v212 = vadd.f32 %v208, %v209
      %213 = vadd.xlane.f32.xlu0 %v212
      %v214 = vpop.xlane.xlu0 %213
      %v215 = vadd.f32 %v210, %v211
      %216 = vadd.xlane.f32.xlu0 %v215
      %v217 = vpop.xlane.xlu0 %216
      %v218 = vadd.f32 %v214, %v217
      %v219 = vmul.f32 %v218, 0.001953125
      %v220 = vadd.f32 %v219, 1e-05
      %v221 = vrsqrt.pop %v220
      %v222 = vmul.f32 %v204, %v221
      %v223 = vmul.f32 %v205, %v221
      %v224 = vmul.f32 %v206, %v221
      %v225 = vmul.f32 %v207, %v221
      %v226 = vld [vmem:[#allocation8] sm:$0xff]
      %v227 = vld [vmem:[#allocation8 + $0x8] sm:$0xff]
      %v228 = vunpack.c.l.bf16 %v226
      %v229 = vunpack.c.h.bf16 %v226
      %v230 = vunpack.c.l.bf16 %v227
      %v231 = vunpack.c.h.bf16 %v227
      %v232 = vadd.f32 %v228, %v229
      %233 = vadd.xlane.f32.xlu0 %v232
      %v234 = vpop.xlane.xlu0 %233
      %v235 = vadd.f32 %v230, %v231
      %236 = vadd.xlane.f32.xlu0 %v235
      %v237 = vpop.xlane.xlu0 %236
      %v238 = vadd.f32 %v234, %v237
      %v239 = vmul.f32 %v238, 0.001953125
      %v240 = vsub.f32 %v228, %v239
      %v241 = vsub.f32 %v229, %v239
      %v242 = vsub.f32 %v230, %v239
      %v243 = vsub.f32 %v231, %v239
      %v244 = vmul.f32 %v240, %v240
      %v245 = vmul.f32 %v241, %v241
      %v246 = vmul.f32 %v242, %v242
      %v247 = vmul.f32 %v243, %v243
      %v248 = vadd.f32 %v244, %v245
      %249 = vadd.xlane.f32.xlu0 %v248
      %v250 = vpop.xlane.xlu0 %249
      %v251 = vadd.f32 %v246, %v247
      %252 = vadd.xlane.f32.xlu0 %v251
      %v253 = vpop.xlane.xlu0 %252
      %v254 = vadd.f32 %v250, %v253
      %v255 = vmul.f32 %v254, 0.001953125
      %v256 = vadd.f32 %v255, 1e-05
      %v257 = vrsqrt.pop %v256
      %v258 = vmul.f32 %v240, %v257
      %v259 = vmul.f32 %v241, %v257
      %v260 = vmul.f32 %v242, %v257
      %v261 = vmul.f32 %v243, %v257
      %v262 = vmax.f32 %v258, %v259
      %263 = vmax.xlane.f32.xlu0 %v262
      %v264 = vpop.xlane.xlu0 %263
      %v265 = vmax.f32 %v260, %v261
      %266 = vmax.xlane.f32.xlu0 %v265
      %v267 = vpop.xlane.xlu0 %266
      %v268 = vmax.f32 %v222, %v223
      %269 = vmax.xlane.f32.xlu0 %v268
      %v270 = vpop.xlane.xlu0 %269
      %v271 = vmax.f32 %v224, %v225
      %272 = vmax.xlane.f32.xlu0 %v271
      %v273 = vpop.xlane.xlu0 %272
      %v274 = vsub.f32 %v258, %v264
      %v275 = vsub.f32 %v259, %v264
      %v276 = vsub.f32 %v260, %v267
      %v277 = vsub.f32 %v261, %v267
      %v278 = vmul.f32 %v274, 1.442695
      %v279 = vpow.pop %v278
      %v280 = vmul.f32 %v275, 1.442695
      %v281 = vpow.pop %v280
      %v282 = vmul.f32 %v276, 1.442695
      %v283 = vpow.pop %v282
      %v284 = vmul.f32 %v277, 1.442695
      %v285 = vpow.pop %v284
      %v286 = vsub.f32 %v222, %v270
      %v287 = vsub.f32 %v223, %v270
      %v288 = vsub.f32 %v224, %v273
      %v289 = vsub.f32 %v225, %v273
      %v290 = vmul.f32 %v286, 1.442695
      %v291 = vpow.pop %v290
      %v292 = vmul.f32 %v287, 1.442695
      %v293 = vpow.pop %v292
      %v294 = vmul.f32 %v288, 1.442695
      %v295 = vpow.pop %v294
      %v296 = vmul.f32 %v289, 1.442695
      %v297 = vpow.pop %v296
      %v298 = vadd.f32 %v279, %v281
      %299 = vadd.xlane.f32.xlu0 %v298
      %v300 = vpop.xlane.xlu0 %299
      %v301 = vadd.f32 %v283, %v285
      %302 = vadd.xlane.f32.xlu0 %v301
      %v303 = vpop.xlane.xlu0 %302
      %v304 = vadd.f32 %v291, %v293
      %305 = vadd.xlane.f32.xlu0 %v304
      %v306 = vpop.xlane.xlu0 %305
      %v307 = vadd.f32 %v295, %v297
      %308 = vadd.xlane.f32.xlu0 %v307
      %v309 = vpop.xlane.xlu0 %308
      %v310 = vsub.f32 %v258, %v222
      %v311 = vsub.f32 %v259, %v223
      %v312 = vsub.f32 %v260, %v224
      %v313 = vsub.f32 %v261, %v225
      %v314 = vmul.f32 %v279, %v310
      %v315 = vmul.f32 %v281, %v311
      %v316 = vmul.f32 %v283, %v312
      %v317 = vmul.f32 %v285, %v313
      %v318 = vadd.f32 %v314, %v315
      %319 = vadd.xlane.f32.xlu0 %v318
      %v320 = vpop.xlane.xlu0 %319
      %v321 = vadd.f32 %v316, %v317
      %322 = vadd.xlane.f32.xlu0 %v321
      %v323 = vpop.xlane.xlu0 %322
      %v324 = vrcp.pop %v300
      %v325 = vmul.f32 1.0, %v324
      %v326 = vrcp.pop %v303
      %v327 = vmul.f32 1.0, %v326
      %v328 = vmul.f32 %v320, %v325
      %v329 = vmul.f32 %v323, %v327
      %v330 = vsub.f32 %v264, %v270
      %v331 = vsub.f32 %v267, %v273
      %v332 = vsub.f32 %v328, %v330
      %v333 = vsub.f32 %v329, %v331
      %v334 = vlog2.pop %v300
      %v335 = vmul.f32 %v334, 0.6931472
      %v336 = vlog2.pop %v303
      %v337 = vmul.f32 %v336, 0.6931472
      %v338 = vsub.f32 %v332, %v335
      %v339 = vsub.f32 %v333, %v337
      %v340 = vlog2.pop %v306
      %v341 = vmul.f32 %v340, 0.6931472
      %v342 = vlog2.pop %v309
      %v343 = vmul.f32 %v342, 0.6931472
      %v344 = vadd.f32 %v338, %v341
      %v345 = vadd.f32 %v339, %v343
      %vm346 = vcmask 7168
      %v347 = vsel %vm346, %v344, 0.0
      %v348 = vsel %vm346, %v345, 0.0
      %v349 = vadd.f32 %v347, %v348
      %350 = vadd.xlane.f32.xlu0 %v349
      %v351 = vpop.xlane.xlu0 %350
      %v352 = vrot.slane %v351, 4
      %v353 = vadd.f32 %v351, %v352
      %v354 = vrot.slane %v353, 2
      %v355 = vadd.f32 %v353, %v354
      %v356 = vrot.slane %v355, 1
      %v357 = vadd.f32 %v355, %v356
      %s358 = vtos %v357
      %s359 = smul.f32 %s358, 0.0625
      %s360 = scalar_lea.smem [#allocation9], 0
      %361 = sst [smem:[%s360]] %s359
    $region33: #{tpu_custom_call.1} parent=1 // pred_fallthru
      _
    // Predicated region
    $region34: #{tpu_custom_call.1} parent=1 // pred_check
      _
    $region35: #{tpu_custom_call.1} parent=1 // pred_check_branch
      %363 = sbr.rel (0) target = $region37
    $region36: #{tpu_custom_call.1} parent=1 // pred_region
      %s365 = ssub.s32 16, 16
      %366 = vsyncadd [#allocation5], %s365
      %369 = dma.smem_to_hbm [#allocation9], 16, %s3, [#allocation5]
    $region37: #{tpu_custom_call.1} parent=1 // pred_fallthru
      _
    // Predicated region
    $region38: #{tpu_custom_call.1} parent=1 // pred_check
      _
    $region39: #{tpu_custom_call.1} parent=1 // pred_check_branch
      %371 = sbr.rel (0) target = $region41
    $region40: #{tpu_custom_call.1} parent=1 // pred_region
      %372 = dma.done [#allocation5], 16
    $region41: #{tpu_custom_call.1} parent=1 // pred_fallthru
      _
    %373 = sfence
    %374 = vsyncpa [#allocation4], 1
    %375 = vsyncpa [#allocation7], 1
    %376 = vsyncpa [#allocation5], 1

</llo_original>
